<compile_context>
chip_gen: v6e
topology: v6e:2x2x1
jax: 0.10.0
libtpu: 0.0.40
codegen_flags: <defaults>
</compile_context>

<pallas_src>
import functools

import jax
import jax.numpy as jnp
from jax import lax
from jax.experimental import pallas as pl
from jax.experimental.pallas import tpu as pltpu


def _round_up(x, m):
    return ((x + m - 1) // m) * m


def _choose_e_tile(v_pad, emb_size, itemsize, budget_bytes):
    """Largest emb tile (multiple of 128 dividing emb_size) whose table strip fits."""
    if emb_size % 128 != 0 or v_pad * emb_size * itemsize <= budget_bytes:
        return emb_size
    candidates = [e for e in range(128, emb_size + 1, 128) if emb_size % e == 0]
    fitting = [e for e in candidates if v_pad * e * itemsize <= budget_bytes]
    if fitting:
        return max(fitting)
    # TODO(synk): even a 128-wide strip busts the budget -> HBM row-DMA gather path.
    return min(candidates)


def _embed_onehot_kernel(idx_ref, table_ref, out_ref, *, v_chunk):
    """Gather table rows for a token block via an exact 0/1 one-hot MXU matmul.

    idx_ref   : (T, 1)        int32  token ids for this token block
    table_ref : (v_pad, Et)   float  table column strip (VMEM-resident across tokens)
    out_ref   : (T, Et)       float  gathered embeddings (dropout p=0.0 == identity)
    """
    ids = idx_ref[...]                       # (T, 1) -- sublane-major, no relayout
    v_pad = table_ref.shape[0]
    n_chunks = v_pad // v_chunk              # static Python int

    def chunk_contribution(start):
        # (1, Vc) iota broadcasts against (T, 1) ids: no (T, V) iota materialized.
        lane_ids = lax.broadcasted_iota(jnp.int32, (1, v_chunk), 1) + start
        one_hot = (ids == lane_ids).astype(table_ref.dtype)          # (T, Vc)
        tbl = table_ref[pl.ds(start, v_chunk), :]                     # (Vc, Et)
        return jnp.dot(one_hot, tbl, preferred_element_type=jnp.float32)

    if n_chunks == 1:
        out_ref[...] = chunk_contribution(0).astype(out_ref.dtype)
    else:
        # Each token id matches exactly one chunk; accumulating the other chunks'
        # zeros is exact in any float dtype, so we can accumulate straight into
        # the output block (no separate scratch accumulator needed).
        out_ref[...] = jnp.zeros_like(out_ref)

        def body(c, carry):
            start = pl.multiple_of(c * v_chunk, 8)
            out_ref[...] += chunk_contribution(start).astype(out_ref.dtype)
            return carry

        lax.fori_loop(0, n_chunks, body, 0, unroll=n_chunks <= 8)


def embed_encoder_forward(inp, embed_weight, hidden, *,
                          block_tokens=512,
                          vocab_chunk=512,
                          table_vmem_budget_bytes=24 * 1024 * 1024):
    """Pallas equivalent of EmbedEncoder.forward(inp, hidden) -> (emb, emb)."""
    del hidden  # accepted but unused, as in the PyTorch module
    seq, batch = inp.shape
    vocab_size, emb_size = embed_weight.shape
    itemsize = jnp.dtype(embed_weight.dtype).itemsize
    num_tokens = seq * batch

    # ---- token blocking (sublane axis of the output) ------------------------
    if num_tokens <= block_tokens:
        t_block = max(8, _round_up(num_tokens, 8))
    else:
        t_block = max(8, (block_tokens // 8) * 8)
        if num_tokens % 8 == 0:
            # Prefer a block that divides num_tokens exactly (no padding and no
            # post-kernel slice copy), without shrinking below half the target.
            for cand in range(t_block, t_block // 2 - 1, -8):
                if num_tokens % cand == 0:
                    t_block = cand
                    break
    padded_tokens = _round_up(num_tokens, t_block)
    n_blocks = padded_tokens // t_block

    # ---- vocab chunking (MXU contraction depth) ------------------------------
    v_chunk = min(max(8, (vocab_chunk // 8) * 8), _round_up(vocab_size, 8))
    v_pad = _round_up(vocab_size, v_chunk)

    # ---- emb tiling: keep the VMEM-resident table strip within budget --------
    e_tile = _choose_e_tile(v_pad, emb_size, itemsize, table_vmem_budget_bytes)
    n_e_tiles = emb_size // e_tile

    # ---- host-side padding / layout ------------------------------------------
    flat_idx = inp.reshape(num_tokens).astype(jnp.int32)
    if padded_tokens != num_tokens:
        # Padded tokens map to row 0 and are sliced away after the kernel.
        flat_idx = jnp.pad(flat_idx, (0, padded_tokens - num_tokens))
    idx_col = flat_idx.reshape(padded_tokens, 1)        # column-major token ids

    table = embed_weight
    if v_pad != vocab_size:
        table = jnp.pad(table, ((0, v_pad - vocab_size), (0, 0)))

    # ---- block specs ----------------------------------------------------------
    table_strip_bytes = v_pad * e_tile * itemsize
    # The table strip is grid-invariant along the inner token axis; single-buffer
    # it once it is big enough that double-buffering would meaningfully eat VMEM
    # (tiny tables keep the default pipelining path).
    single_buffer_table = table_strip_bytes > (8 << 20)
    table_spec_kwargs = {}
    if single_buffer_table:
        table_spec_kwargs["pipeline_mode"] = pl.Buffered(1)

    in_specs = [
        # Token ids: (t_block, 1) blocks -- legal (8,128) tiling for any n_blocks.
        pl.BlockSpec((t_block, 1), lambda j, i: (i, 0)),
        # Table strip: index depends only on the OUTER emb-tile axis, so each
        # strip is DMA'd from HBM once and stays resident across token blocks.
        pl.BlockSpec((v_pad, e_tile), lambda j, i: (0, j), **table_spec_kwargs),
    ]
    out_spec = pl.BlockSpec((t_block, e_tile), lambda j, i: (i, j))

    # ---- VMEM limit + cost estimate -------------------------------------------
    table_bufs = 1 if single_buffer_table else 2
    vmem_need = (table_bufs * table_strip_bytes
                 + 2 * t_block * e_tile * itemsize        # double-buffered out blocks
                 + 2 * t_block * 4                        # double-buffered id blocks
                 + t_block * v_chunk * 4                  # per-chunk one-hot
                 + t_block * e_tile * 4)                  # matmul result tile
    vmem_limit = int(min(max(vmem_need + (8 << 20), 32 << 20), 100 << 20))

    flops = 2 * padded_tokens * v_pad * emb_size
    bytes_accessed = (v_pad * emb_size * itemsize          # table read once
                      + n_e_tiles * padded_tokens * 4      # ids re-read per emb tile
                      + padded_tokens * emb_size * itemsize)  # output written once

    flat_emb = pl.pallas_call(
        functools.partial(_embed_onehot_kernel, v_chunk=v_chunk),
        out_shape=jax.ShapeDtypeStruct((padded_tokens, emb_size), embed_weight.dtype),
        grid_spec=pltpu.PrefetchScalarGridSpec(
            num_scalar_prefetch=0,
            grid=(n_e_tiles, n_blocks),     # emb tiles outer, token blocks inner
            in_specs=in_specs,
            out_specs=out_spec,
        ),
        compiler_params=pltpu.CompilerParams(
            dimension_semantics=("parallel", "parallel"),
            vmem_limit_bytes=vmem_limit,
        ),
        cost_estimate=pl.CostEstimate(
            flops=flops, transcendentals=0, bytes_accessed=bytes_accessed),
    )(idx_col, table)

    emb = flat_emb[:num_tokens].reshape(seq, batch, emb_size)
    # The PyTorch module returns (emb, emb).
    return emb, emb


def init_hidden(embed_weight, batch_size, hidden_size):
    return jnp.zeros((1, batch_size, hidden_size), dtype=embed_weight.dtype)


if __name__ == "__main__":
    key = jax.random.PRNGKey(0)
    k1, k2, k3, k4 = jax.random.split(key, 4)

    def check_case(k_w, k_idx, vocab_size, emb_size, seq, batch, **fwd_kwargs):
        hidden_size = emb_size  # module asserts emb_size == hidden_size
        # init_weights: uniform(-0.1, 0.1) on the embedding table.
        embed_weight = jax.random.uniform(
            k_w, (vocab_size, emb_size), dtype=jnp.float32, minval=-0.1, maxval=0.1)
        inp = jax.random.randint(k_idx, (seq, batch), 0, vocab_size, dtype=jnp.int32)
        hidden = init_hidden(embed_weight, batch, hidden_size)

        emb, emb2 = embed_encoder_forward(inp, embed_weight, hidden, **fwd_kwargs)
        jax.block_until_ready(emb)
        jax.block_until_ready(emb2)

        # Reference check (plain-JAX embedding lookup).
        ref = jnp.take(embed_weight, inp.reshape(-1), axis=0).reshape(
            seq, batch, emb_size)
        assert emb.shape == (seq, batch, emb_size)
        assert jnp.allclose(emb, ref), "embedding mismatch vs jnp.take reference"
        assert jnp.allclose(emb2, ref), "second output mismatch"

    # Case 1: small vocab -> single-chunk fast path, single token block / emb tile.
    check_case(k1, k2, vocab_size=32, emb_size=128, seq=8, batch=2)

    # Case 2 (still tiny): exercises vocab chunking (2 chunks), multiple token
    # blocks (2) and multiple emb tiles (2) by shrinking the block / budget knobs.
    check_case(k3, k4, vocab_size=600, emb_size=256, seq=16, batch=4,
               block_tokens=32, table_vmem_budget_bytes=600 * 1024)

    print("KERNEL_OK")
</pallas_src>

<mosaic_0001>
module attributes {stable_mosaic.version = 11 : i64} {
  func.func @_embed_onehot_kernel(%arg0: i32, %arg1: i32, %arg2: memref<16x1xi32, #tpu.memory_space<vmem>>, %arg3: memref<32x128xf32, #tpu.memory_space<vmem>>, %arg4: memref<16x128xf32, #tpu.memory_space<vmem>>) attributes {dimension_semantics = [#tpu.dimension_semantics<parallel>, #tpu.dimension_semantics<parallel>], iteration_bounds = array<i64: 1, 1>, scalar_prefetch = 0 : i64, scratch_operands = 0 : i64, tpu.core_type = #tpu.core_type<tc>, window_params = [{transform_indices = @transform_0, window_bounds = array<i64: 16, 1>}, {transform_indices = @transform_1, window_bounds = array<i64: 32, 128>}, {transform_indices = @transform_2, window_bounds = array<i64: 16, 128>}]} {
    %c0 = arith.constant 0 : index
    %c0_0 = arith.constant 0 : index
    %0 = vector.load %arg2[%c0, %c0_0] : memref<16x1xi32, #tpu.memory_space<vmem>>, vector<16x1xi32>
    %1 = tpu.iota {dimensions = array<i32: 1>} : vector<1x32xi32>
    %c0_i32 = arith.constant 0 : i32
    %2 = vector.broadcast %c0_i32 : i32 to vector<1x32xi32>
    %3 = arith.addi %1, %2 : vector<1x32xi32>
    %4 = vector.broadcast %0 : vector<16x1xi32> to vector<16x32xi32>
    %5 = vector.broadcast %3 : vector<1x32xi32> to vector<16x32xi32>
    %6 = arith.cmpi eq, %4, %5 : vector<16x32xi32>
    %7 = arith.extui %6 : vector<16x32xi1> to vector<16x32xi32>
    %8 = arith.sitofp %7 : vector<16x32xi32> to vector<16x32xf32>
    %c0_1 = arith.constant 0 : index
    %c0_2 = arith.constant 0 : index
    %9 = vector.load %arg3[%c0_1, %c0_2] : memref<32x128xf32, #tpu.memory_space<vmem>>, vector<32x128xf32>
    %cst = arith.constant dense<0.000000e+00> : vector<16x128xf32>
    %10 = tpu.matmul %8, %9, %cst {dimension_numbers = #tpu.dot_dimension_numbers<[1], [0], [0], [1], [0, 0, 1, 1], [], []>} : vector<16x32xf32>, vector<32x128xf32>, vector<16x128xf32> -> vector<16x128xf32>
    %c0_3 = arith.constant 0 : index
    %c0_4 = arith.constant 0 : index
    %11 = vector.load %arg4[%c0_3, %c0_4] : memref<16x128xf32, #tpu.memory_space<vmem>>, vector<16x128xf32>
    tpu.vector_store %arg4[%c0_3, %c0_4], %10 {strides = array<i32>} : memref<16x128xf32, #tpu.memory_space<vmem>>, vector<16x128xf32>,
    return
  }
  func.func @transform_0(%arg0: i32, %arg1: i32) -> (i32, i32) {
    %c0_i32 = arith.constant 0 : i32
    %c0_i32_0 = arith.constant 0 : i32
    return %arg1, %c0_i32 : i32, i32
  }
  func.func @transform_1(%arg0: i32, %arg1: i32) -> (i32, i32) {
    %c0_i32 = arith.constant 0 : i32
    %c0_i32_0 = arith.constant 0 : i32
    return %c0_i32, %arg0 : i32, i32
  }
  func.func @transform_2(%arg0: i32, %arg1: i32) -> (i32, i32) {
    %c0_i32 = arith.constant 0 : i32
    return %arg1, %arg0 : i32, i32
  }
}

</mosaic_0001>

<llo_original>
// kernel: tpu_custom_call.1
$region0: #{tpu_custom_call.1}
  #allocation0 [shape = 'u32[]', space=smem, size = 0x4, offset = 0x4, fixed_abs, tag = 'smem constant byte address 0x4 - core index']
  #allocation1 [shape = 'u32[144,128]{1,0:T(1,128)}', space=vmem, size = 0x12000, scoped, tag = 'internal scratch']
  %s0 = inlined_call_operand.vmem [shape: s32[16,1], index: 0, kind: input, shape index: {}]
  %s1 = inlined_call_operand.hbm [shape: f32[32,128], index: 1, kind: input, shape index: {}]
  %s2 = inlined_call_operand.hbm [shape: f32[16,128], index: 2, kind: output, shape index: {}]
  %s3 = sld [smem:[#allocation0]]
  $region22: #{tpu_custom_call.1} parent=0
    _
  %s5 = ssub.s32 1, %s3
  %s6 = scalar_select 0, %s5, %s3
  $region1: #{tpu_custom_call.1} parent=0
    #allocation2 [shape = 'u8[16384]{0}', space=vmem, size = 0x4000, scoped, tag = 'input window, operand 1, single buffered']
    #allocation3 [shape = 's32[1]{0}', space=sflag, size = 0x4, scoped, tag = 'scoped memory for tpu_custom_call.1']
    #allocation4 [shape = 's32[1]{0}', space=sflag, size = 0x4, scoped, tag = 'scoped memory for tpu_custom_call.1']
    #allocation5 [shape = 'u8[8192]{0}', space=vmem, size = 0x2000, scoped, tag = 'output window, operand 0, single buffered']
    %7 = vsyncpa [#allocation3], 0
    %8 = vsyncpa [#allocation4], 0
    // Predicated region
    $region2: #{tpu_custom_call.1} parent=1 // pred_check
      _
    $region3: #{tpu_custom_call.1} parent=1 // pred_check_branch
      %10 = sbr.rel (0) target = $region5
    $region4: #{tpu_custom_call.1} parent=1 // pred_region
      _
    $region5: #{tpu_custom_call.1} parent=1 // pred_fallthru
      _
    // Predicated region
    $region6: #{tpu_custom_call.1} parent=1 // pred_check
      _
    $region7: #{tpu_custom_call.1} parent=1 // pred_check_branch
      %12 = sbr.rel (0) target = $region9
    $region8: #{tpu_custom_call.1} parent=1 // pred_region
      %s14 = ssub.s32 512, 512
      %15 = vsyncadd [#allocation3], %s14
      %s16 = sshll.u32 [#allocation2], 4
      %s17 = int_to_ptr.vmem [resolvable:$true] %s16
      %22 = dma.hbm_to_vmem [thread:$0]  %s1, 512, %s17, [#allocation3], 128, 128, 8
    $region9: #{tpu_custom_call.1} parent=1 // pred_fallthru
      _
    // Predicated region
    $region10: #{tpu_custom_call.1} parent=1 // pred_check
      _
    $region11: #{tpu_custom_call.1} parent=1 // pred_check_branch
      %24 = sbr.rel (0) target = $region13
    $region12: #{tpu_custom_call.1} parent=1 // pred_region
      %25 = dma.done [#allocation3], 512
    $region13: #{tpu_custom_call.1} parent=1 // pred_fallthru
      _
    %v26 = vld [vmem:[%s0] sm:$0xff]
    %v27 = vld [vmem:[%s0 + $0x8] sm:$0xff]
    %v28 = vlaneseq
    %v29 = vand.u32 %v28, 127
    %30 = vset.pattern.permute.xlu0 0
    %31 = vperm.xlu0 %30, %v26
    %v32 = vpop.permute.xlu0 %31
    %33 = vset.pattern.permute.xlu0 0
    %34 = vperm.xlu0 %33, %v27
    %v35 = vpop.permute.xlu0 %34
    %vm36 = vcmp.eq.s32.totalorder %v32, %v29
    %vm37 = vcmp.eq.s32.totalorder %v35, %v29
    %v38 = vsel %vm36, 1, 0
    %v39 = vsel %vm37, 1, 0
    %v40 = vcvt.s32.f32 %v38
    %v41 = vcvt.s32.f32 %v39
    %v42 = vld [vmem:[#allocation2] sm:$0xff]
    %v43 = vld [vmem:[#allocation2 + $0x8] sm:$0xff]
    %v44 = vld [vmem:[#allocation2 + $0x10] sm:$0xff]
    %v45 = vld [vmem:[#allocation2 + $0x18] sm:$0xff]
    %vm46 = vcmask 261120
    %v48 = vsel %vm46, %v40, 0
    %v51 = vsel %vm46, %v41, 0
    %53 = vmatprep.subr.mxu0 0.0
    %54 = vmatpush1.msra.mxu0 0.0
    %55 = vmatprep.subr.mxu0 0.0
    %56 = vmatpush1.msra.mxu0 0.0
    %57 = vmatprep.subr.mxu0 0.0
    %58 = vmatpush1.msra.mxu0 0.0
    %59 = vmatprep.subr.mxu0 0.0
    %60 = vmatpush1.msra.mxu0 0.0
    %61 = vmatprep.subr.mxu0 0.0
    %62 = vmatpush1.msra.mxu0 0.0
    %63 = vmatprep.subr.mxu0 0.0
    %64 = vmatpush1.msra.mxu0 0.0
    %65 = vmatprep.subr.mxu0 0.0
    %66 = vmatpush1.msra.mxu0 0.0
    %67 = vmatprep.subr.mxu0 0.0
    %68 = vmatpush1.msra.mxu0 0.0
    %69 = vmatprep.subr.mxu0 0.0
    %70 = vmatpush1.msra.mxu0 0.0
    %71 = vmatprep.subr.mxu0 0.0
    %72 = vmatpush1.msra.mxu0 0.0
    %73 = vmatprep.subr.mxu0 0.0
    %74 = vmatpush1.msra.mxu0 0.0
    %75 = vmatprep.subr.mxu0 0.0
    %76 = vmatpush1.msra.mxu0 0.0
    %77 = vmatprep.subr.mxu0 0.0
    %78 = vmatpush1.msra.mxu0 %v45
    %79 = vmatprep.subr.mxu0 0.0
    %80 = vmatpush1.msra.mxu0 %v44
    %81 = vmatprep.subr.mxu0 0.0
    %82 = vmatpush1.msra.mxu0 %v43
    %83 = vmatprep.subr.mxu0 0.0
    %84 = vmatpush1.msra.mxu0 %v42
    %85 = vmatprep.subr.mxu0 0.0
    %86 = vmatpush2.msra.mxu0 0.0
    %87 = vmatprep.subr.mxu0 0.0
    %88 = vmatpush2.msra.mxu0 0.0
    %89 = vmatprep.subr.mxu0 0.0
    %90 = vmatpush2.msra.mxu0 0.0
    %91 = vmatprep.subr.mxu0 0.0
    %92 = vmatpush2.msra.mxu0 0.0
    %93 = vmatprep.subr.mxu0 0.0
    %94 = vmatpush2.msra.mxu0 0.0
    %95 = vmatprep.subr.mxu0 0.0
    %96 = vmatpush2.msra.mxu0 0.0
    %97 = vmatprep.subr.mxu0 0.0
    %98 = vmatpush2.msra.mxu0 0.0
    %99 = vmatprep.subr.mxu0 0.0
    %100 = vmatpush2.msra.mxu0 0.0
    %101 = vmatprep.subr.mxu0 0.0
    %102 = vmatpush2.msra.mxu0 0.0
    %103 = vmatprep.subr.mxu0 0.0
    %104 = vmatpush2.msra.mxu0 0.0
    %105 = vmatprep.subr.mxu0 0.0
    %106 = vmatpush2.msra.mxu0 0.0
    %107 = vmatprep.subr.mxu0 0.0
    %108 = vmatpush2.msra.mxu0 0.0
    %109 = vmatprep.subr.mxu0 0.0
    %110 = vmatpush2.msra.mxu0 0.0
    %111 = vmatprep.subr.mxu0 0.0
    %112 = vmatpush2.msra.mxu0 0.0
    %113 = vmatprep.subr.mxu0 0.0
    %114 = vmatpush2.msra.mxu0 0.0
    %115 = vmatprep.subr.mxu0 0.0
    %116 = vmatpush2.msra.mxu0 0.0
    %117 = vmatprep.mubr.f32.mxu0 0.0
    %118 = vmatmul.mubr.f32.gmra.mxu0 %v48
    %v119 = vpop.f32.mrf.mxu0
    %v120 = vadd.f32 0.0, %v119
    %v121 = vpop.f32.mrf.mxu0
    %122 = vmatprep.mubr.f32.mxu0 0.0
    %123 = vmatmul.mubr.f32.gmra.mxu0 %v51
    %v124 = vpop.f32.mrf.mxu0
    %v125 = vadd.f32 0.0, %v124
    %v126 = vpop.f32.mrf.mxu0
    %127 = vdwg.mxu0
    %128 = vst [vmem:[#allocation5] sm:$0xff] %v120
    %129 = vst [vmem:[#allocation5 + $0x8] sm:$0xff] %v125
    // Predicated region
    $region14: #{tpu_custom_call.1} parent=1 // pred_check
      _
    $region15: #{tpu_custom_call.1} parent=1 // pred_check_branch
      %131 = sbr.rel (0) target = $region17
    $region16: #{tpu_custom_call.1} parent=1 // pred_region
      %s133 = ssub.s32 256, 256
      %134 = vsyncadd [#allocation4], %s133
      %s135 = sshll.u32 [#allocation5], 4
      %s136 = int_to_ptr.vmem [resolvable:$true] %s135
      %141 = dma.vmem_to_hbm [thread:$0]  %s136, 256, %s2, [#allocation4], 128, 128, 8
    $region17: #{tpu_custom_call.1} parent=1 // pred_fallthru
      _
    // Predicated region
    $region18: #{tpu_custom_call.1} parent=1 // pred_check
      _
    $region19: #{tpu_custom_call.1} parent=1 // pred_check_branch
      %143 = sbr.rel (0) target = $region21
    $region20: #{tpu_custom_call.1} parent=1 // pred_region
      %144 = dma.done [#allocation4], 256
    $region21: #{tpu_custom_call.1} parent=1 // pred_fallthru
      _
    %145 = vsyncpa [#allocation3], 1
    %146 = vsyncpa [#allocation4], 1

</llo_original>
